<compile_context>
chip_gen: v7x
topology: tpu7x:2x2x1
jax: 0.10.0
libtpu: 0.0.40
codegen_flags: <defaults>
</compile_context>

<pallas_src>
import jax
import jax.numpy as jnp
from jax.experimental import pallas as pl
from jax.experimental.pallas import tpu as pltpu

# (fan_in, fan_out) of the 4 Linear layers in the PyTorch module.
_LAYER_SIZES = ((8, 6), (6, 4), (4, 2), (2, 1))
_N_FEATURES = _LAYER_SIZES[0][0]
_N_PARAMS = sum(fi * fo + fo for fi, fo in _LAYER_SIZES)  # 95 scalars


def _round_up(n, m):
    return ((n + m - 1) // m) * m


def _cdiv(a, b):
    return -(-a // b)


def mlp_kernel(p_ref, x_ref, o_ref):
    # p_ref : SMEM f32[95]      — packed [W1 (fout x fin, row-major), b1, W2, b2, ...]
    # x_ref : VMEM (8, S, 128)  — features major, batch on (sublane, lane)
    # o_ref : VMEM (S, 128)     — fully dense output block
    # Activations are (S, 128) slabs; all math is VPU broadcast-FMAs + one EUP tanh
    # per activation.
    h = [x_ref[k] for k in range(_N_FEATURES)]
    off = 0
    for fin, fout in _LAYER_SIZES:
        nxt = []
        for j in range(fout):
            # z_j = b_j + sum_k W[j, k] * h_k   (scalar weights broadcast over the slab)
            z = h[0] * p_ref[off + j * fin]
            for k in range(1, fin):
                z = z + h[k] * p_ref[off + j * fin + k]
            z = z + p_ref[off + fin * fout + j]
            # sigmoid(z) = 0.5 * (tanh(0.5 * z) + 1)  — single EUP op per activation
            nxt.append(0.5 * (jnp.tanh(0.5 * z) + 1.0))
        off += fin * fout + fout
        h = nxt
    o_ref[...] = h[0]


def pack_params(params):
    """Pack all weights (as [fout, fin] row-major) and biases into one flat f32 vector."""
    chunks = []
    for w, b in params:                      # w: (fin, fout), b: (1, fout)
        chunks.append(jnp.transpose(w).reshape(-1))
        chunks.append(jnp.reshape(b, (-1,)))
    return jnp.concatenate(chunks).astype(jnp.float32)


def _choose_tiling(n, max_tile):
    """Pick a lane-tile (multiple of 1024 so blocks are (8,128)-dense) and padded size."""
    n1 = _round_up(n, 1024)
    num_tiles = max(1, _cdiv(n1, max_tile))
    if num_tiles == 1 and n1 > 1024:
        num_tiles = 2            # keep >=2 grid steps so both v7x TensorCores get work
    tile = _round_up(_cdiv(n1, num_tiles), 1024)
    return tile, tile * num_tiles, num_tiles


def mlp_forward(x, params, *, max_tile=32768):
    N, fin0 = x.shape
    assert fin0 == _N_FEATURES
    p_flat = pack_params(params)

    tile, n_pad, num_tiles = _choose_tiling(N, max_tile)
    sub = tile // 128                      # sublane extent of one block (multiple of 8)

    # Batch on (sublane, lane); transpose + tail-pad once, then a free contiguous reshape.
    xT = jnp.transpose(x.astype(jnp.float32))                 # (8, N)
    if n_pad != N:
        xT = jnp.pad(xT, ((0, 0), (0, n_pad - N)))            # zero tail -> harmless 0.5s
    x3d = xT.reshape(_N_FEATURES, n_pad // 128, 128)

    flops = 2 * n_pad * sum(fi * fo for fi, fo in _LAYER_SIZES)
    transcendentals = n_pad * sum(fo for _, fo in _LAYER_SIZES)
    bytes_accessed = x3d.size * 4 + n_pad * 4 + _N_PARAMS * 4

    out = pl.pallas_call(
        mlp_kernel,
        out_shape=jax.ShapeDtypeStruct((n_pad // 128, 128), jnp.float32),
        grid=(num_tiles,),
        in_specs=[
            pl.BlockSpec(memory_space=pltpu.MemorySpace.SMEM),           # packed params
            pl.BlockSpec((_N_FEATURES, sub, 128), lambda i: (0, i, 0)),  # activation tile
        ],
        out_specs=pl.BlockSpec((sub, 128), lambda i: (i, 0)),
        compiler_params=pltpu.CompilerParams(
            dimension_semantics=("parallel",),
            allow_input_fusion=[False, True]),   # let XLA fuse the transpose/pad into the DMA
        cost_estimate=pl.CostEstimate(
            flops=flops,
            transcendentals=transcendentals,
            bytes_accessed=bytes_accessed),
    )(p_flat, x3d)

    return out.reshape(n_pad)[:N].reshape(N, 1)


def init_params(key):
    # Deterministic init mimicking torch.nn.Linear default (uniform(-1/sqrt(in), 1/sqrt(in))).
    params = []
    for (fin, fout) in _LAYER_SIZES:
        key, kw, kb = jax.random.split(key, 3)
        bound = 1.0 / (fin ** 0.5)
        w = jax.random.uniform(kw, (fin, fout), jnp.float32, -bound, bound)
        b = jax.random.uniform(kb, (1, fout), jnp.float32, -bound, bound)
        params.append((w, b))
    return params


def _reference(x, params):
    h = x
    for (w, b) in params:
        h = jax.nn.sigmoid(h @ w + b)
    return h


if __name__ == "__main__":
    key = jax.random.PRNGKey(0)
    kx, kx2, kp = jax.random.split(key, 3)
    params = init_params(kp)

    # Small batch (single 1024-lane tile, grid=(1,)).
    N = 16
    x = jax.random.normal(kx, (N, _N_FEATURES), jnp.float32)
    out = mlp_forward(x, params)
    jax.block_until_ready(out)
    ref = _reference(x, params)
    assert out.shape == (N, 1)
    assert jnp.allclose(out, ref, atol=1e-5, rtol=1e-5), "mismatch vs reference (small)"

    # Larger batch to exercise the multi-tile parallel grid (2 grid steps).
    N2 = 4096
    x2 = jax.random.normal(kx2, (N2, _N_FEATURES), jnp.float32)
    out2 = mlp_forward(x2, params)
    jax.block_until_ready(out2)
    ref2 = _reference(x2, params)
    assert out2.shape == (N2, 1)
    assert jnp.allclose(out2, ref2, atol=1e-5, rtol=1e-5), "mismatch vs reference (large)"

    print("KERNEL_OK")
</pallas_src>

<mosaic_0001>
module attributes {stable_mosaic.version = 11 : i64} {
  func.func @mlp_kernel(%arg0: i32, %arg1: memref<95xf32, #tpu.memory_space<smem>>, %arg2: memref<8x8x128xf32, #tpu.memory_space<vmem>>, %arg3: memref<8x128xf32, #tpu.memory_space<vmem>>) attributes {dimension_semantics = [#tpu.dimension_semantics<parallel>], iteration_bounds = array<i64: 1>, scalar_prefetch = 0 : i64, scratch_operands = 0 : i64, tpu.core_type = #tpu.core_type<tc>, window_params = [{transform_indices = @transform_0, window_bounds = array<i64: 95>}, {transform_indices = @transform_1, window_bounds = array<i64: 8, 8, 128>}, {transform_indices = @transform_2, window_bounds = array<i64: 8, 128>}]} {
    %c0 = arith.constant 0 : index
    %c0_0 = arith.constant 0 : index
    %c0_1 = arith.constant 0 : index
    %0 = vector.load %arg2[%c0, %c0_0, %c0_1] : memref<8x8x128xf32, #tpu.memory_space<vmem>>, vector<1x8x128xf32>
    %1 = vector.shape_cast %0 : vector<1x8x128xf32> to vector<8x128xf32>
    %c1 = arith.constant 1 : index
    %c0_2 = arith.constant 0 : index
    %c0_3 = arith.constant 0 : index
    %2 = vector.load %arg2[%c1, %c0_2, %c0_3] : memref<8x8x128xf32, #tpu.memory_space<vmem>>, vector<1x8x128xf32>
    %3 = vector.shape_cast %2 : vector<1x8x128xf32> to vector<8x128xf32>
    %c2 = arith.constant 2 : index
    %c0_4 = arith.constant 0 : index
    %c0_5 = arith.constant 0 : index
    %4 = vector.load %arg2[%c2, %c0_4, %c0_5] : memref<8x8x128xf32, #tpu.memory_space<vmem>>, vector<1x8x128xf32>
    %5 = vector.shape_cast %4 : vector<1x8x128xf32> to vector<8x128xf32>
    %c3 = arith.constant 3 : index
    %c0_6 = arith.constant 0 : index
    %c0_7 = arith.constant 0 : index
    %6 = vector.load %arg2[%c3, %c0_6, %c0_7] : memref<8x8x128xf32, #tpu.memory_space<vmem>>, vector<1x8x128xf32>
    %7 = vector.shape_cast %6 : vector<1x8x128xf32> to vector<8x128xf32>
    %c4 = arith.constant 4 : index
    %c0_8 = arith.constant 0 : index
    %c0_9 = arith.constant 0 : index
    %8 = vector.load %arg2[%c4, %c0_8, %c0_9] : memref<8x8x128xf32, #tpu.memory_space<vmem>>, vector<1x8x128xf32>
    %9 = vector.shape_cast %8 : vector<1x8x128xf32> to vector<8x128xf32>
    %c5 = arith.constant 5 : index
    %c0_10 = arith.constant 0 : index
    %c0_11 = arith.constant 0 : index
    %10 = vector.load %arg2[%c5, %c0_10, %c0_11] : memref<8x8x128xf32, #tpu.memory_space<vmem>>, vector<1x8x128xf32>
    %11 = vector.shape_cast %10 : vector<1x8x128xf32> to vector<8x128xf32>
    %c6 = arith.constant 6 : index
    %c0_12 = arith.constant 0 : index
    %c0_13 = arith.constant 0 : index
    %12 = vector.load %arg2[%c6, %c0_12, %c0_13] : memref<8x8x128xf32, #tpu.memory_space<vmem>>, vector<1x8x128xf32>
    %13 = vector.shape_cast %12 : vector<1x8x128xf32> to vector<8x128xf32>
    %c7 = arith.constant 7 : index
    %c0_14 = arith.constant 0 : index
    %c0_15 = arith.constant 0 : index
    %14 = vector.load %arg2[%c7, %c0_14, %c0_15] : memref<8x8x128xf32, #tpu.memory_space<vmem>>, vector<1x8x128xf32>
    %15 = vector.shape_cast %14 : vector<1x8x128xf32> to vector<8x128xf32>
    %c0_16 = arith.constant 0 : index
    %16 = memref.load %arg1[%c0_16] : memref<95xf32, #tpu.memory_space<smem>>
    %17 = vector.broadcast %16 : f32 to vector<8x128xf32>
    %18 = arith.mulf %1, %17 : vector<8x128xf32>
    %c1_17 = arith.constant 1 : index
    %19 = memref.load %arg1[%c1_17] : memref<95xf32, #tpu.memory_space<smem>>
    %20 = vector.broadcast %19 : f32 to vector<8x128xf32>
    %21 = arith.mulf %3, %20 : vector<8x128xf32>
    %22 = arith.addf %18, %21 : vector<8x128xf32>
    %c2_18 = arith.constant 2 : index
    %23 = memref.load %arg1[%c2_18] : memref<95xf32, #tpu.memory_space<smem>>
    %24 = vector.broadcast %23 : f32 to vector<8x128xf32>
    %25 = arith.mulf %5, %24 : vector<8x128xf32>
    %26 = arith.addf %22, %25 : vector<8x128xf32>
    %c3_19 = arith.constant 3 : index
    %27 = memref.load %arg1[%c3_19] : memref<95xf32, #tpu.memory_space<smem>>
    %28 = vector.broadcast %27 : f32 to vector<8x128xf32>
    %29 = arith.mulf %7, %28 : vector<8x128xf32>
    %30 = arith.addf %26, %29 : vector<8x128xf32>
    %c4_20 = arith.constant 4 : index
    %31 = memref.load %arg1[%c4_20] : memref<95xf32, #tpu.memory_space<smem>>
    %32 = vector.broadcast %31 : f32 to vector<8x128xf32>
    %33 = arith.mulf %9, %32 : vector<8x128xf32>
    %34 = arith.addf %30, %33 : vector<8x128xf32>
    %c5_21 = arith.constant 5 : index
    %35 = memref.load %arg1[%c5_21] : memref<95xf32, #tpu.memory_space<smem>>
    %36 = vector.broadcast %35 : f32 to vector<8x128xf32>
    %37 = arith.mulf %11, %36 : vector<8x128xf32>
    %38 = arith.addf %34, %37 : vector<8x128xf32>
    %c6_22 = arith.constant 6 : index
    %39 = memref.load %arg1[%c6_22] : memref<95xf32, #tpu.memory_space<smem>>
    %40 = vector.broadcast %39 : f32 to vector<8x128xf32>
    %41 = arith.mulf %13, %40 : vector<8x128xf32>
    %42 = arith.addf %38, %41 : vector<8x128xf32>
    %c7_23 = arith.constant 7 : index
    %43 = memref.load %arg1[%c7_23] : memref<95xf32, #tpu.memory_space<smem>>
    %44 = vector.broadcast %43 : f32 to vector<8x128xf32>
    %45 = arith.mulf %15, %44 : vector<8x128xf32>
    %46 = arith.addf %42, %45 : vector<8x128xf32>
    %c48 = arith.constant 48 : index
    %47 = memref.load %arg1[%c48] : memref<95xf32, #tpu.memory_space<smem>>
    %48 = vector.broadcast %47 : f32 to vector<8x128xf32>
    %49 = arith.addf %46, %48 : vector<8x128xf32>
    %cst = arith.constant 5.000000e-01 : f32
    %50 = vector.broadcast %cst : f32 to vector<8x128xf32>
    %51 = arith.mulf %50, %49 : vector<8x128xf32>
    %52 = math.tanh %51 : vector<8x128xf32>
    %cst_24 = arith.constant 1.000000e+00 : f32
    %53 = vector.broadcast %cst_24 : f32 to vector<8x128xf32>
    %54 = arith.addf %52, %53 : vector<8x128xf32>
    %cst_25 = arith.constant 5.000000e-01 : f32
    %55 = vector.broadcast %cst_25 : f32 to vector<8x128xf32>
    %56 = arith.mulf %55, %54 : vector<8x128xf32>
    %c8 = arith.constant 8 : index
    %57 = memref.load %arg1[%c8] : memref<95xf32, #tpu.memory_space<smem>>
    %58 = vector.broadcast %57 : f32 to vector<8x128xf32>
    %59 = arith.mulf %1, %58 : vector<8x128xf32>
    %c9 = arith.constant 9 : index
    %60 = memref.load %arg1[%c9] : memref<95xf32, #tpu.memory_space<smem>>
    %61 = vector.broadcast %60 : f32 to vector<8x128xf32>
    %62 = arith.mulf %3, %61 : vector<8x128xf32>
    %63 = arith.addf %59, %62 : vector<8x128xf32>
    %c10 = arith.constant 10 : index
    %64 = memref.load %arg1[%c10] : memref<95xf32, #tpu.memory_space<smem>>
    %65 = vector.broadcast %64 : f32 to vector<8x128xf32>
    %66 = arith.mulf %5, %65 : vector<8x128xf32>
    %67 = arith.addf %63, %66 : vector<8x128xf32>
    %c11 = arith.constant 11 : index
    %68 = memref.load %arg1[%c11] : memref<95xf32, #tpu.memory_space<smem>>
    %69 = vector.broadcast %68 : f32 to vector<8x128xf32>
    %70 = arith.mulf %7, %69 : vector<8x128xf32>
    %71 = arith.addf %67, %70 : vector<8x128xf32>
    %c12 = arith.constant 12 : index
    %72 = memref.load %arg1[%c12] : memref<95xf32, #tpu.memory_space<smem>>
    %73 = vector.broadcast %72 : f32 to vector<8x128xf32>
    %74 = arith.mulf %9, %73 : vector<8x128xf32>
    %75 = arith.addf %71, %74 : vector<8x128xf32>
    %c13 = arith.constant 13 : index
    %76 = memref.load %arg1[%c13] : memref<95xf32, #tpu.memory_space<smem>>
    %77 = vector.broadcast %76 : f32 to vector<8x128xf32>
    %78 = arith.mulf %11, %77 : vector<8x128xf32>
    %79 = arith.addf %75, %78 : vector<8x128xf32>
    %c14 = arith.constant 14 : index
    %80 = memref.load %arg1[%c14] : memref<95xf32, #tpu.memory_space<smem>>
    %81 = vector.broadcast %80 : f32 to vector<8x128xf32>
    %82 = arith.mulf %13, %81 : vector<8x128xf32>
    %83 = arith.addf %79, %82 : vector<8x128xf32>
    %c15 = arith.constant 15 : index
    %84 = memref.load %arg1[%c15] : memref<95xf32, #tpu.memory_space<smem>>
    %85 = vector.broadcast %84 : f32 to vector<8x128xf32>
    %86 = arith.mulf %15, %85 : vector<8x128xf32>
    %87 = arith.addf %83, %86 : vector<8x128xf32>
    %c49 = arith.constant 49 : index
    %88 = memref.load %arg1[%c49] : memref<95xf32, #tpu.memory_space<smem>>
    %89 = vector.broadcast %88 : f32 to vector<8x128xf32>
    %90 = arith.addf %87, %89 : vector<8x128xf32>
    %cst_26 = arith.constant 5.000000e-01 : f32
    %91 = vector.broadcast %cst_26 : f32 to vector<8x128xf32>
    %92 = arith.mulf %91, %90 : vector<8x128xf32>
    %93 = math.tanh %92 : vector<8x128xf32>
    %cst_27 = arith.constant 1.000000e+00 : f32
    %94 = vector.broadcast %cst_27 : f32 to vector<8x128xf32>
    %95 = arith.addf %93, %94 : vector<8x128xf32>
    %cst_28 = arith.constant 5.000000e-01 : f32
    %96 = vector.broadcast %cst_28 : f32 to vector<8x128xf32>
    %97 = arith.mulf %96, %95 : vector<8x128xf32>
    %c16 = arith.constant 16 : index
    %98 = memref.load %arg1[%c16] : memref<95xf32, #tpu.memory_space<smem>>
    %99 = vector.broadcast %98 : f32 to vector<8x128xf32>
    %100 = arith.mulf %1, %99 : vector<8x128xf32>
    %c17 = arith.constant 17 : index
    %101 = memref.load %arg1[%c17] : memref<95xf32, #tpu.memory_space<smem>>
    %102 = vector.broadcast %101 : f32 to vector<8x128xf32>
    %103 = arith.mulf %3, %102 : vector<8x128xf32>
    %104 = arith.addf %100, %103 : vector<8x128xf32>
    %c18 = arith.constant 18 : index
    %105 = memref.load %arg1[%c18] : memref<95xf32, #tpu.memory_space<smem>>
    %106 = vector.broadcast %105 : f32 to vector<8x128xf32>
    %107 = arith.mulf %5, %106 : vector<8x128xf32>
    %108 = arith.addf %104, %107 : vector<8x128xf32>
    %c19 = arith.constant 19 : index
    %109 = memref.load %arg1[%c19] : memref<95xf32, #tpu.memory_space<smem>>
    %110 = vector.broadcast %109 : f32 to vector<8x128xf32>
    %111 = arith.mulf %7, %110 : vector<8x128xf32>
    %112 = arith.addf %108, %111 : vector<8x128xf32>
    %c20 = arith.constant 20 : index
    %113 = memref.load %arg1[%c20] : memref<95xf32, #tpu.memory_space<smem>>
    %114 = vector.broadcast %113 : f32 to vector<8x128xf32>
    %115 = arith.mulf %9, %114 : vector<8x128xf32>
    %116 = arith.addf %112, %115 : vector<8x128xf32>
    %c21 = arith.constant 21 : index
    %117 = memref.load %arg1[%c21] : memref<95xf32, #tpu.memory_space<smem>>
    %118 = vector.broadcast %117 : f32 to vector<8x128xf32>
    %119 = arith.mulf %11, %118 : vector<8x128xf32>
    %120 = arith.addf %116, %119 : vector<8x128xf32>
    %c22 = arith.constant 22 : index
    %121 = memref.load %arg1[%c22] : memref<95xf32, #tpu.memory_space<smem>>
    %122 = vector.broadcast %121 : f32 to vector<8x128xf32>
    %123 = arith.mulf %13, %122 : vector<8x128xf32>
    %124 = arith.addf %120, %123 : vector<8x128xf32>
    %c23 = arith.constant 23 : index
    %125 = memref.load %arg1[%c23] : memref<95xf32, #tpu.memory_space<smem>>
    %126 = vector.broadcast %125 : f32 to vector<8x128xf32>
    %127 = arith.mulf %15, %126 : vector<8x128xf32>
    %128 = arith.addf %124, %127 : vector<8x128xf32>
    %c50 = arith.constant 50 : index
    %129 = memref.load %arg1[%c50] : memref<95xf32, #tpu.memory_space<smem>>
    %130 = vector.broadcast %129 : f32 to vector<8x128xf32>
    %131 = arith.addf %128, %130 : vector<8x128xf32>
    %cst_29 = arith.constant 5.000000e-01 : f32
    %132 = vector.broadcast %cst_29 : f32 to vector<8x128xf32>
    %133 = arith.mulf %132, %131 : vector<8x128xf32>
    %134 = math.tanh %133 : vector<8x128xf32>
    %cst_30 = arith.constant 1.000000e+00 : f32
    %135 = vector.broadcast %cst_30 : f32 to vector<8x128xf32>
    %136 = arith.addf %134, %135 : vector<8x128xf32>
    %cst_31 = arith.constant 5.000000e-01 : f32
    %137 = vector.broadcast %cst_31 : f32 to vector<8x128xf32>
    %138 = arith.mulf %137, %136 : vector<8x128xf32>
    %c24 = arith.constant 24 : index
    %139 = memref.load %arg1[%c24] : memref<95xf32, #tpu.memory_space<smem>>
    %140 = vector.broadcast %139 : f32 to vector<8x128xf32>
    %141 = arith.mulf %1, %140 : vector<8x128xf32>
    %c25 = arith.constant 25 : index
    %142 = memref.load %arg1[%c25] : memref<95xf32, #tpu.memory_space<smem>>
    %143 = vector.broadcast %142 : f32 to vector<8x128xf32>
    %144 = arith.mulf %3, %143 : vector<8x128xf32>
    %145 = arith.addf %141, %144 : vector<8x128xf32>
    %c26 = arith.constant 26 : index
    %146 = memref.load %arg1[%c26] : memref<95xf32, #tpu.memory_space<smem>>
    %147 = vector.broadcast %146 : f32 to vector<8x128xf32>
    %148 = arith.mulf %5, %147 : vector<8x128xf32>
    %149 = arith.addf %145, %148 : vector<8x128xf32>
    %c27 = arith.constant 27 : index
    %150 = memref.load %arg1[%c27] : memref<95xf32, #tpu.memory_space<smem>>
    %151 = vector.broadcast %150 : f32 to vector<8x128xf32>
    %152 = arith.mulf %7, %151 : vector<8x128xf32>
    %153 = arith.addf %149, %152 : vector<8x128xf32>
    %c28 = arith.constant 28 : index
    %154 = memref.load %arg1[%c28] : memref<95xf32, #tpu.memory_space<smem>>
    %155 = vector.broadcast %154 : f32 to vector<8x128xf32>
    %156 = arith.mulf %9, %155 : vector<8x128xf32>
    %157 = arith.addf %153, %156 : vector<8x128xf32>
    %c29 = arith.constant 29 : index
    %158 = memref.load %arg1[%c29] : memref<95xf32, #tpu.memory_space<smem>>
    %159 = vector.broadcast %158 : f32 to vector<8x128xf32>
    %160 = arith.mulf %11, %159 : vector<8x128xf32>
    %161 = arith.addf %157, %160 : vector<8x128xf32>
    %c30 = arith.constant 30 : index
    %162 = memref.load %arg1[%c30] : memref<95xf32, #tpu.memory_space<smem>>
    %163 = vector.broadcast %162 : f32 to vector<8x128xf32>
    %164 = arith.mulf %13, %163 : vector<8x128xf32>
    %165 = arith.addf %161, %164 : vector<8x128xf32>
    %c31 = arith.constant 31 : index
    %166 = memref.load %arg1[%c31] : memref<95xf32, #tpu.memory_space<smem>>
    %167 = vector.broadcast %166 : f32 to vector<8x128xf32>
    %168 = arith.mulf %15, %167 : vector<8x128xf32>
    %169 = arith.addf %165, %168 : vector<8x128xf32>
    %c51 = arith.constant 51 : index
    %170 = memref.load %arg1[%c51] : memref<95xf32, #tpu.memory_space<smem>>
    %171 = vector.broadcast %170 : f32 to vector<8x128xf32>
    %172 = arith.addf %169, %171 : vector<8x128xf32>
    %cst_32 = arith.constant 5.000000e-01 : f32
    %173 = vector.broadcast %cst_32 : f32 to vector<8x128xf32>
    %174 = arith.mulf %173, %172 : vector<8x128xf32>
    %175 = math.tanh %174 : vector<8x128xf32>
    %cst_33 = arith.constant 1.000000e+00 : f32
    %176 = vector.broadcast %cst_33 : f32 to vector<8x128xf32>
    %177 = arith.addf %175, %176 : vector<8x128xf32>
    %cst_34 = arith.constant 5.000000e-01 : f32
    %178 = vector.broadcast %cst_34 : f32 to vector<8x128xf32>
    %179 = arith.mulf %178, %177 : vector<8x128xf32>
    %c32 = arith.constant 32 : index
    %180 = memref.load %arg1[%c32] : memref<95xf32, #tpu.memory_space<smem>>
    %181 = vector.broadcast %180 : f32 to vector<8x128xf32>
    %182 = arith.mulf %1, %181 : vector<8x128xf32>
    %c33 = arith.constant 33 : index
    %183 = memref.load %arg1[%c33] : memref<95xf32, #tpu.memory_space<smem>>
    %184 = vector.broadcast %183 : f32 to vector<8x128xf32>
    %185 = arith.mulf %3, %184 : vector<8x128xf32>
    %186 = arith.addf %182, %185 : vector<8x128xf32>
    %c34 = arith.constant 34 : index
    %187 = memref.load %arg1[%c34] : memref<95xf32, #tpu.memory_space<smem>>
    %188 = vector.broadcast %187 : f32 to vector<8x128xf32>
    %189 = arith.mulf %5, %188 : vector<8x128xf32>
    %190 = arith.addf %186, %189 : vector<8x128xf32>
    %c35 = arith.constant 35 : index
    %191 = memref.load %arg1[%c35] : memref<95xf32, #tpu.memory_space<smem>>
    %192 = vector.broadcast %191 : f32 to vector<8x128xf32>
    %193 = arith.mulf %7, %192 : vector<8x128xf32>
    %194 = arith.addf %190, %193 : vector<8x128xf32>
    %c36 = arith.constant 36 : index
    %195 = memref.load %arg1[%c36] : memref<95xf32, #tpu.memory_space<smem>>
    %196 = vector.broadcast %195 : f32 to vector<8x128xf32>
    %197 = arith.mulf %9, %196 : vector<8x128xf32>
    %198 = arith.addf %194, %197 : vector<8x128xf32>
    %c37 = arith.constant 37 : index
    %199 = memref.load %arg1[%c37] : memref<95xf32, #tpu.memory_space<smem>>
    %200 = vector.broadcast %199 : f32 to vector<8x128xf32>
    %201 = arith.mulf %11, %200 : vector<8x128xf32>
    %202 = arith.addf %198, %201 : vector<8x128xf32>
    %c38 = arith.constant 38 : index
    %203 = memref.load %arg1[%c38] : memref<95xf32, #tpu.memory_space<smem>>
    %204 = vector.broadcast %203 : f32 to vector<8x128xf32>
    %205 = arith.mulf %13, %204 : vector<8x128xf32>
    %206 = arith.addf %202, %205 : vector<8x128xf32>
    %c39 = arith.constant 39 : index
    %207 = memref.load %arg1[%c39] : memref<95xf32, #tpu.memory_space<smem>>
    %208 = vector.broadcast %207 : f32 to vector<8x128xf32>
    %209 = arith.mulf %15, %208 : vector<8x128xf32>
    %210 = arith.addf %206, %209 : vector<8x128xf32>
    %c52 = arith.constant 52 : index
    %211 = memref.load %arg1[%c52] : memref<95xf32, #tpu.memory_space<smem>>
    %212 = vector.broadcast %211 : f32 to vector<8x128xf32>
    %213 = arith.addf %210, %212 : vector<8x128xf32>
    %cst_35 = arith.constant 5.000000e-01 : f32
    %214 = vector.broadcast %cst_35 : f32 to vector<8x128xf32>
    %215 = arith.mulf %214, %213 : vector<8x128xf32>
    %216 = math.tanh %215 : vector<8x128xf32>
    %cst_36 = arith.constant 1.000000e+00 : f32
    %217 = vector.broadcast %cst_36 : f32 to vector<8x128xf32>
    %218 = arith.addf %216, %217 : vector<8x128xf32>
    %cst_37 = arith.constant 5.000000e-01 : f32
    %219 = vector.broadcast %cst_37 : f32 to vector<8x128xf32>
    %220 = arith.mulf %219, %218 : vector<8x128xf32>
    %c40 = arith.constant 40 : index
    %221 = memref.load %arg1[%c40] : memref<95xf32, #tpu.memory_space<smem>>
    %222 = vector.broadcast %221 : f32 to vector<8x128xf32>
    %223 = arith.mulf %1, %222 : vector<8x128xf32>
    %c41 = arith.constant 41 : index
    %224 = memref.load %arg1[%c41] : memref<95xf32, #tpu.memory_space<smem>>
    %225 = vector.broadcast %224 : f32 to vector<8x128xf32>
    %226 = arith.mulf %3, %225 : vector<8x128xf32>
    %227 = arith.addf %223, %226 : vector<8x128xf32>
    %c42 = arith.constant 42 : index
    %228 = memref.load %arg1[%c42] : memref<95xf32, #tpu.memory_space<smem>>
    %229 = vector.broadcast %228 : f32 to vector<8x128xf32>
    %230 = arith.mulf %5, %229 : vector<8x128xf32>
    %231 = arith.addf %227, %230 : vector<8x128xf32>
    %c43 = arith.constant 43 : index
    %232 = memref.load %arg1[%c43] : memref<95xf32, #tpu.memory_space<smem>>
    %233 = vector.broadcast %232 : f32 to vector<8x128xf32>
    %234 = arith.mulf %7, %233 : vector<8x128xf32>
    %235 = arith.addf %231, %234 : vector<8x128xf32>
    %c44 = arith.constant 44 : index
    %236 = memref.load %arg1[%c44] : memref<95xf32, #tpu.memory_space<smem>>
    %237 = vector.broadcast %236 : f32 to vector<8x128xf32>
    %238 = arith.mulf %9, %237 : vector<8x128xf32>
    %239 = arith.addf %235, %238 : vector<8x128xf32>
    %c45 = arith.constant 45 : index
    %240 = memref.load %arg1[%c45] : memref<95xf32, #tpu.memory_space<smem>>
    %241 = vector.broadcast %240 : f32 to vector<8x128xf32>
    %242 = arith.mulf %11, %241 : vector<8x128xf32>
    %243 = arith.addf %239, %242 : vector<8x128xf32>
    %c46 = arith.constant 46 : index
    %244 = memref.load %arg1[%c46] : memref<95xf32, #tpu.memory_space<smem>>
    %245 = vector.broadcast %244 : f32 to vector<8x128xf32>
    %246 = arith.mulf %13, %245 : vector<8x128xf32>
    %247 = arith.addf %243, %246 : vector<8x128xf32>
    %c47 = arith.constant 47 : index
    %248 = memref.load %arg1[%c47] : memref<95xf32, #tpu.memory_space<smem>>
    %249 = vector.broadcast %248 : f32 to vector<8x128xf32>
    %250 = arith.mulf %15, %249 : vector<8x128xf32>
    %251 = arith.addf %247, %250 : vector<8x128xf32>
    %c53 = arith.constant 53 : index
    %252 = memref.load %arg1[%c53] : memref<95xf32, #tpu.memory_space<smem>>
    %253 = vector.broadcast %252 : f32 to vector<8x128xf32>
    %254 = arith.addf %251, %253 : vector<8x128xf32>
    %cst_38 = arith.constant 5.000000e-01 : f32
    %255 = vector.broadcast %cst_38 : f32 to vector<8x128xf32>
    %256 = arith.mulf %255, %254 : vector<8x128xf32>
    %257 = math.tanh %256 : vector<8x128xf32>
    %cst_39 = arith.constant 1.000000e+00 : f32
    %258 = vector.broadcast %cst_39 : f32 to vector<8x128xf32>
    %259 = arith.addf %257, %258 : vector<8x128xf32>
    %cst_40 = arith.constant 5.000000e-01 : f32
    %260 = vector.broadcast %cst_40 : f32 to vector<8x128xf32>
    %261 = arith.mulf %260, %259 : vector<8x128xf32>
    %c54 = arith.constant 54 : index
    %262 = memref.load %arg1[%c54] : memref<95xf32, #tpu.memory_space<smem>>
    %263 = vector.broadcast %262 : f32 to vector<8x128xf32>
    %264 = arith.mulf %56, %263 : vector<8x128xf32>
    %c55 = arith.constant 55 : index
    %265 = memref.load %arg1[%c55] : memref<95xf32, #tpu.memory_space<smem>>
    %266 = vector.broadcast %265 : f32 to vector<8x128xf32>
    %267 = arith.mulf %97, %266 : vector<8x128xf32>
    %268 = arith.addf %264, %267 : vector<8x128xf32>
    %c56 = arith.constant 56 : index
    %269 = memref.load %arg1[%c56] : memref<95xf32, #tpu.memory_space<smem>>
    %270 = vector.broadcast %269 : f32 to vector<8x128xf32>
    %271 = arith.mulf %138, %270 : vector<8x128xf32>
    %272 = arith.addf %268, %271 : vector<8x128xf32>
    %c57 = arith.constant 57 : index
    %273 = memref.load %arg1[%c57] : memref<95xf32, #tpu.memory_space<smem>>
    %274 = vector.broadcast %273 : f32 to vector<8x128xf32>
    %275 = arith.mulf %179, %274 : vector<8x128xf32>
    %276 = arith.addf %272, %275 : vector<8x128xf32>
    %c58 = arith.constant 58 : index
    %277 = memref.load %arg1[%c58] : memref<95xf32, #tpu.memory_space<smem>>
    %278 = vector.broadcast %277 : f32 to vector<8x128xf32>
    %279 = arith.mulf %220, %278 : vector<8x128xf32>
    %280 = arith.addf %276, %279 : vector<8x128xf32>
    %c59 = arith.constant 59 : index
    %281 = memref.load %arg1[%c59] : memref<95xf32, #tpu.memory_space<smem>>
    %282 = vector.broadcast %281 : f32 to vector<8x128xf32>
    %283 = arith.mulf %261, %282 : vector<8x128xf32>
    %284 = arith.addf %280, %283 : vector<8x128xf32>
    %c78 = arith.constant 78 : index
    %285 = memref.load %arg1[%c78] : memref<95xf32, #tpu.memory_space<smem>>
    %286 = vector.broadcast %285 : f32 to vector<8x128xf32>
    %287 = arith.addf %284, %286 : vector<8x128xf32>
    %cst_41 = arith.constant 5.000000e-01 : f32
    %288 = vector.broadcast %cst_41 : f32 to vector<8x128xf32>
    %289 = arith.mulf %288, %287 : vector<8x128xf32>
    %290 = math.tanh %289 : vector<8x128xf32>
    %cst_42 = arith.constant 1.000000e+00 : f32
    %291 = vector.broadcast %cst_42 : f32 to vector<8x128xf32>
    %292 = arith.addf %290, %291 : vector<8x128xf32>
    %cst_43 = arith.constant 5.000000e-01 : f32
    %293 = vector.broadcast %cst_43 : f32 to vector<8x128xf32>
    %294 = arith.mulf %293, %292 : vector<8x128xf32>
    %c60 = arith.constant 60 : index
    %295 = memref.load %arg1[%c60] : memref<95xf32, #tpu.memory_space<smem>>
    %296 = vector.broadcast %295 : f32 to vector<8x128xf32>
    %297 = arith.mulf %56, %296 : vector<8x128xf32>
    %c61 = arith.constant 61 : index
    %298 = memref.load %arg1[%c61] : memref<95xf32, #tpu.memory_space<smem>>
    %299 = vector.broadcast %298 : f32 to vector<8x128xf32>
    %300 = arith.mulf %97, %299 : vector<8x128xf32>
    %301 = arith.addf %297, %300 : vector<8x128xf32>
    %c62 = arith.constant 62 : index
    %302 = memref.load %arg1[%c62] : memref<95xf32, #tpu.memory_space<smem>>
    %303 = vector.broadcast %302 : f32 to vector<8x128xf32>
    %304 = arith.mulf %138, %303 : vector<8x128xf32>
    %305 = arith.addf %301, %304 : vector<8x128xf32>
    %c63 = arith.constant 63 : index
    %306 = memref.load %arg1[%c63] : memref<95xf32, #tpu.memory_space<smem>>
    %307 = vector.broadcast %306 : f32 to vector<8x128xf32>
    %308 = arith.mulf %179, %307 : vector<8x128xf32>
    %309 = arith.addf %305, %308 : vector<8x128xf32>
    %c64 = arith.constant 64 : index
    %310 = memref.load %arg1[%c64] : memref<95xf32, #tpu.memory_space<smem>>
    %311 = vector.broadcast %310 : f32 to vector<8x128xf32>
    %312 = arith.mulf %220, %311 : vector<8x128xf32>
    %313 = arith.addf %309, %312 : vector<8x128xf32>
    %c65 = arith.constant 65 : index
    %314 = memref.load %arg1[%c65] : memref<95xf32, #tpu.memory_space<smem>>
    %315 = vector.broadcast %314 : f32 to vector<8x128xf32>
    %316 = arith.mulf %261, %315 : vector<8x128xf32>
    %317 = arith.addf %313, %316 : vector<8x128xf32>
    %c79 = arith.constant 79 : index
    %318 = memref.load %arg1[%c79] : memref<95xf32, #tpu.memory_space<smem>>
    %319 = vector.broadcast %318 : f32 to vector<8x128xf32>
    %320 = arith.addf %317, %319 : vector<8x128xf32>
    %cst_44 = arith.constant 5.000000e-01 : f32
    %321 = vector.broadcast %cst_44 : f32 to vector<8x128xf32>
    %322 = arith.mulf %321, %320 : vector<8x128xf32>
    %323 = math.tanh %322 : vector<8x128xf32>
    %cst_45 = arith.constant 1.000000e+00 : f32
    %324 = vector.broadcast %cst_45 : f32 to vector<8x128xf32>
    %325 = arith.addf %323, %324 : vector<8x128xf32>
    %cst_46 = arith.constant 5.000000e-01 : f32
    %326 = vector.broadcast %cst_46 : f32 to vector<8x128xf32>
    %327 = arith.mulf %326, %325 : vector<8x128xf32>
    %c66 = arith.constant 66 : index
    %328 = memref.load %arg1[%c66] : memref<95xf32, #tpu.memory_space<smem>>
    %329 = vector.broadcast %328 : f32 to vector<8x128xf32>
    %330 = arith.mulf %56, %329 : vector<8x128xf32>
    %c67 = arith.constant 67 : index
    %331 = memref.load %arg1[%c67] : memref<95xf32, #tpu.memory_space<smem>>
    %332 = vector.broadcast %331 : f32 to vector<8x128xf32>
    %333 = arith.mulf %97, %332 : vector<8x128xf32>
    %334 = arith.addf %330, %333 : vector<8x128xf32>
    %c68 = arith.constant 68 : index
    %335 = memref.load %arg1[%c68] : memref<95xf32, #tpu.memory_space<smem>>
    %336 = vector.broadcast %335 : f32 to vector<8x128xf32>
    %337 = arith.mulf %138, %336 : vector<8x128xf32>
    %338 = arith.addf %334, %337 : vector<8x128xf32>
    %c69 = arith.constant 69 : index
    %339 = memref.load %arg1[%c69] : memref<95xf32, #tpu.memory_space<smem>>
    %340 = vector.broadcast %339 : f32 to vector<8x128xf32>
    %341 = arith.mulf %179, %340 : vector<8x128xf32>
    %342 = arith.addf %338, %341 : vector<8x128xf32>
    %c70 = arith.constant 70 : index
    %343 = memref.load %arg1[%c70] : memref<95xf32, #tpu.memory_space<smem>>
    %344 = vector.broadcast %343 : f32 to vector<8x128xf32>
    %345 = arith.mulf %220, %344 : vector<8x128xf32>
    %346 = arith.addf %342, %345 : vector<8x128xf32>
    %c71 = arith.constant 71 : index
    %347 = memref.load %arg1[%c71] : memref<95xf32, #tpu.memory_space<smem>>
    %348 = vector.broadcast %347 : f32 to vector<8x128xf32>
    %349 = arith.mulf %261, %348 : vector<8x128xf32>
    %350 = arith.addf %346, %349 : vector<8x128xf32>
    %c80 = arith.constant 80 : index
    %351 = memref.load %arg1[%c80] : memref<95xf32, #tpu.memory_space<smem>>
    %352 = vector.broadcast %351 : f32 to vector<8x128xf32>
    %353 = arith.addf %350, %352 : vector<8x128xf32>
    %cst_47 = arith.constant 5.000000e-01 : f32
    %354 = vector.broadcast %cst_47 : f32 to vector<8x128xf32>
    %355 = arith.mulf %354, %353 : vector<8x128xf32>
    %356 = math.tanh %355 : vector<8x128xf32>
    %cst_48 = arith.constant 1.000000e+00 : f32
    %357 = vector.broadcast %cst_48 : f32 to vector<8x128xf32>
    %358 = arith.addf %356, %357 : vector<8x128xf32>
    %cst_49 = arith.constant 5.000000e-01 : f32
    %359 = vector.broadcast %cst_49 : f32 to vector<8x128xf32>
    %360 = arith.mulf %359, %358 : vector<8x128xf32>
    %c72 = arith.constant 72 : index
    %361 = memref.load %arg1[%c72] : memref<95xf32, #tpu.memory_space<smem>>
    %362 = vector.broadcast %361 : f32 to vector<8x128xf32>
    %363 = arith.mulf %56, %362 : vector<8x128xf32>
    %c73 = arith.constant 73 : index
    %364 = memref.load %arg1[%c73] : memref<95xf32, #tpu.memory_space<smem>>
    %365 = vector.broadcast %364 : f32 to vector<8x128xf32>
    %366 = arith.mulf %97, %365 : vector<8x128xf32>
    %367 = arith.addf %363, %366 : vector<8x128xf32>
    %c74 = arith.constant 74 : index
    %368 = memref.load %arg1[%c74] : memref<95xf32, #tpu.memory_space<smem>>
    %369 = vector.broadcast %368 : f32 to vector<8x128xf32>
    %370 = arith.mulf %138, %369 : vector<8x128xf32>
    %371 = arith.addf %367, %370 : vector<8x128xf32>
    %c75 = arith.constant 75 : index
    %372 = memref.load %arg1[%c75] : memref<95xf32, #tpu.memory_space<smem>>
    %373 = vector.broadcast %372 : f32 to vector<8x128xf32>
    %374 = arith.mulf %179, %373 : vector<8x128xf32>
    %375 = arith.addf %371, %374 : vector<8x128xf32>
    %c76 = arith.constant 76 : index
    %376 = memref.load %arg1[%c76] : memref<95xf32, #tpu.memory_space<smem>>
    %377 = vector.broadcast %376 : f32 to vector<8x128xf32>
    %378 = arith.mulf %220, %377 : vector<8x128xf32>
    %379 = arith.addf %375, %378 : vector<8x128xf32>
    %c77 = arith.constant 77 : index
    %380 = memref.load %arg1[%c77] : memref<95xf32, #tpu.memory_space<smem>>
    %381 = vector.broadcast %380 : f32 to vector<8x128xf32>
    %382 = arith.mulf %261, %381 : vector<8x128xf32>
    %383 = arith.addf %379, %382 : vector<8x128xf32>
    %c81 = arith.constant 81 : index
    %384 = memref.load %arg1[%c81] : memref<95xf32, #tpu.memory_space<smem>>
    %385 = vector.broadcast %384 : f32 to vector<8x128xf32>
    %386 = arith.addf %383, %385 : vector<8x128xf32>
    %cst_50 = arith.constant 5.000000e-01 : f32
    %387 = vector.broadcast %cst_50 : f32 to vector<8x128xf32>
    %388 = arith.mulf %387, %386 : vector<8x128xf32>
    %389 = math.tanh %388 : vector<8x128xf32>
    %cst_51 = arith.constant 1.000000e+00 : f32
    %390 = vector.broadcast %cst_51 : f32 to vector<8x128xf32>
    %391 = arith.addf %389, %390 : vector<8x128xf32>
    %cst_52 = arith.constant 5.000000e-01 : f32
    %392 = vector.broadcast %cst_52 : f32 to vector<8x128xf32>
    %393 = arith.mulf %392, %391 : vector<8x128xf32>
    %c82 = arith.constant 82 : index
    %394 = memref.load %arg1[%c82] : memref<95xf32, #tpu.memory_space<smem>>
    %395 = vector.broadcast %394 : f32 to vector<8x128xf32>
    %396 = arith.mulf %294, %395 : vector<8x128xf32>
    %c83 = arith.constant 83 : index
    %397 = memref.load %arg1[%c83] : memref<95xf32, #tpu.memory_space<smem>>
    %398 = vector.broadcast %397 : f32 to vector<8x128xf32>
    %399 = arith.mulf %327, %398 : vector<8x128xf32>
    %400 = arith.addf %396, %399 : vector<8x128xf32>
    %c84 = arith.constant 84 : index
    %401 = memref.load %arg1[%c84] : memref<95xf32, #tpu.memory_space<smem>>
    %402 = vector.broadcast %401 : f32 to vector<8x128xf32>
    %403 = arith.mulf %360, %402 : vector<8x128xf32>
    %404 = arith.addf %400, %403 : vector<8x128xf32>
    %c85 = arith.constant 85 : index
    %405 = memref.load %arg1[%c85] : memref<95xf32, #tpu.memory_space<smem>>
    %406 = vector.broadcast %405 : f32 to vector<8x128xf32>
    %407 = arith.mulf %393, %406 : vector<8x128xf32>
    %408 = arith.addf %404, %407 : vector<8x128xf32>
    %c90 = arith.constant 90 : index
    %409 = memref.load %arg1[%c90] : memref<95xf32, #tpu.memory_space<smem>>
    %410 = vector.broadcast %409 : f32 to vector<8x128xf32>
    %411 = arith.addf %408, %410 : vector<8x128xf32>
    %cst_53 = arith.constant 5.000000e-01 : f32
    %412 = vector.broadcast %cst_53 : f32 to vector<8x128xf32>
    %413 = arith.mulf %412, %411 : vector<8x128xf32>
    %414 = math.tanh %413 : vector<8x128xf32>
    %cst_54 = arith.constant 1.000000e+00 : f32
    %415 = vector.broadcast %cst_54 : f32 to vector<8x128xf32>
    %416 = arith.addf %414, %415 : vector<8x128xf32>
    %cst_55 = arith.constant 5.000000e-01 : f32
    %417 = vector.broadcast %cst_55 : f32 to vector<8x128xf32>
    %418 = arith.mulf %417, %416 : vector<8x128xf32>
    %c86 = arith.constant 86 : index
    %419 = memref.load %arg1[%c86] : memref<95xf32, #tpu.memory_space<smem>>
    %420 = vector.broadcast %419 : f32 to vector<8x128xf32>
    %421 = arith.mulf %294, %420 : vector<8x128xf32>
    %c87 = arith.constant 87 : index
    %422 = memref.load %arg1[%c87] : memref<95xf32, #tpu.memory_space<smem>>
    %423 = vector.broadcast %422 : f32 to vector<8x128xf32>
    %424 = arith.mulf %327, %423 : vector<8x128xf32>
    %425 = arith.addf %421, %424 : vector<8x128xf32>
    %c88 = arith.constant 88 : index
    %426 = memref.load %arg1[%c88] : memref<95xf32, #tpu.memory_space<smem>>
    %427 = vector.broadcast %426 : f32 to vector<8x128xf32>
    %428 = arith.mulf %360, %427 : vector<8x128xf32>
    %429 = arith.addf %425, %428 : vector<8x128xf32>
    %c89 = arith.constant 89 : index
    %430 = memref.load %arg1[%c89] : memref<95xf32, #tpu.memory_space<smem>>
    %431 = vector.broadcast %430 : f32 to vector<8x128xf32>
    %432 = arith.mulf %393, %431 : vector<8x128xf32>
    %433 = arith.addf %429, %432 : vector<8x128xf32>
    %c91 = arith.constant 91 : index
    %434 = memref.load %arg1[%c91] : memref<95xf32, #tpu.memory_space<smem>>
    %435 = vector.broadcast %434 : f32 to vector<8x128xf32>
    %436 = arith.addf %433, %435 : vector<8x128xf32>
    %cst_56 = arith.constant 5.000000e-01 : f32
    %437 = vector.broadcast %cst_56 : f32 to vector<8x128xf32>
    %438 = arith.mulf %437, %436 : vector<8x128xf32>
    %439 = math.tanh %438 : vector<8x128xf32>
    %cst_57 = arith.constant 1.000000e+00 : f32
    %440 = vector.broadcast %cst_57 : f32 to vector<8x128xf32>
    %441 = arith.addf %439, %440 : vector<8x128xf32>
    %cst_58 = arith.constant 5.000000e-01 : f32
    %442 = vector.broadcast %cst_58 : f32 to vector<8x128xf32>
    %443 = arith.mulf %442, %441 : vector<8x128xf32>
    %c92 = arith.constant 92 : index
    %444 = memref.load %arg1[%c92] : memref<95xf32, #tpu.memory_space<smem>>
    %445 = vector.broadcast %444 : f32 to vector<8x128xf32>
    %446 = arith.mulf %418, %445 : vector<8x128xf32>
    %c93 = arith.constant 93 : index
    %447 = memref.load %arg1[%c93] : memref<95xf32, #tpu.memory_space<smem>>
    %448 = vector.broadcast %447 : f32 to vector<8x128xf32>
    %449 = arith.mulf %443, %448 : vector<8x128xf32>
    %450 = arith.addf %446, %449 : vector<8x128xf32>
    %c94 = arith.constant 94 : index
    %451 = memref.load %arg1[%c94] : memref<95xf32, #tpu.memory_space<smem>>
    %452 = vector.broadcast %451 : f32 to vector<8x128xf32>
    %453 = arith.addf %450, %452 : vector<8x128xf32>
    %cst_59 = arith.constant 5.000000e-01 : f32
    %454 = vector.broadcast %cst_59 : f32 to vector<8x128xf32>
    %455 = arith.mulf %454, %453 : vector<8x128xf32>
    %456 = math.tanh %455 : vector<8x128xf32>
    %cst_60 = arith.constant 1.000000e+00 : f32
    %457 = vector.broadcast %cst_60 : f32 to vector<8x128xf32>
    %458 = arith.addf %456, %457 : vector<8x128xf32>
    %cst_61 = arith.constant 5.000000e-01 : f32
    %459 = vector.broadcast %cst_61 : f32 to vector<8x128xf32>
    %460 = arith.mulf %459, %458 : vector<8x128xf32>
    %c0_62 = arith.constant 0 : index
    %c0_63 = arith.constant 0 : index
    %461 = vector.load %arg3[%c0_62, %c0_63] : memref<8x128xf32, #tpu.memory_space<vmem>>, vector<8x128xf32>
    tpu.vector_store %arg3[%c0_62, %c0_63], %460 {strides = array<i32>} : memref<8x128xf32, #tpu.memory_space<vmem>>, vector<8x128xf32>,
    return
  }
  func.func @transform_0(%arg0: i32) -> i32 {
    %c0_i32 = arith.constant 0 : i32
    %c0_i32_0 = arith.constant 0 : i32
    return %c0_i32 : i32
  }
  func.func @transform_1(%arg0: i32) -> (i32, i32, i32) {
    %c0_i32 = arith.constant 0 : i32
    %c0_i32_0 = arith.constant 0 : i32
    %c0_i32_1 = arith.constant 0 : i32
    return %c0_i32, %arg0, %c0_i32_0 : i32, i32, i32
  }
  func.func @transform_2(%arg0: i32) -> (i32, i32) {
    %c0_i32 = arith.constant 0 : i32
    %c0_i32_0 = arith.constant 0 : i32
    return %arg0, %c0_i32 : i32, i32
  }
}

</mosaic_0001>

<llo_original>
// kernel: tpu_custom_call.1
$region0: #{tpu_custom_call.1}
  #allocation0 [shape = 'u32[]', space=smem, size = 0x4, offset = 0x4, fixed_abs, tag = 'smem constant byte address 0x4 - core index']
  #allocation1 [shape = 'u32[144,128]{1,0:T(1,128)}', space=vmem, size = 0x12000, scoped, tag = 'internal scratch']
  %s0 = inlined_call_operand.hbm [shape: f32[95], index: 0, kind: input, shape index: {}]
  %s1 = inlined_call_operand.hbm [shape: f32[8,8,128], index: 1, kind: input, shape index: {}]
  %s2 = inlined_call_operand.hbm [shape: f32[8,128], index: 2, kind: output, shape index: {}]
  %s3 = sld [smem:[#allocation0]]
  $region26: #{tpu_custom_call.1} parent=0
    _
  %s5 = ssub.s32 1, %s3
  %s6 = scalar_select 0, %s5, %s3
  $region1: #{tpu_custom_call.1} parent=0
    #allocation2 [shape = 'u8[512]{0}', space=smem, size = 0x200, scoped, tag = 'input window, operand 0, single buffered']
    #allocation3 [shape = 's32[1]{0}', space=sflag, size = 0x4, scoped, tag = 'scoped memory for tpu_custom_call.1']
    #allocation4 [shape = 's32[1]{0}', space=sflag, size = 0x4, scoped, tag = 'scoped memory for tpu_custom_call.1']
    #allocation5 [shape = 's32[1]{0}', space=sflag, size = 0x4, scoped, tag = 'scoped memory for tpu_custom_call.1']
    #allocation6 [shape = 'u8[32768]{0}', space=vmem, size = 0x8000, scoped, tag = 'input window, operand 1, single buffered']
    #allocation7 [shape = 'u8[4096]{0}', space=vmem, size = 0x1000, scoped, tag = 'output window, operand 0, single buffered']
    %7 = vsyncpa [#allocation5], 0
    %8 = vsyncpa [#allocation3], 0
    %9 = vsyncpa [#allocation4], 0
    // Predicated region
    $region2: #{tpu_custom_call.1} parent=1 // pred_check
      _
    $region3: #{tpu_custom_call.1} parent=1 // pred_check_branch
      %11 = sbr.rel (0) target = $region5
    $region4: #{tpu_custom_call.1} parent=1 // pred_region
      %s13 = ssub.s32 16, 16
      %14 = vsyncadd [#allocation5], %s13
      %17 = dma.hbm_to_smem %s0, 16, [#allocation2], [#allocation5]
    $region5: #{tpu_custom_call.1} parent=1 // pred_fallthru
      _
    // Predicated region
    $region6: #{tpu_custom_call.1} parent=1 // pred_check
      _
    $region7: #{tpu_custom_call.1} parent=1 // pred_check_branch
      %19 = sbr.rel (0) target = $region9
    $region8: #{tpu_custom_call.1} parent=1 // pred_region
      %s21 = ssub.s32 1024, 1024
      %22 = vsyncadd [#allocation3], %s21
      %s23 = sshll.u32 [#allocation6], 4
      %s24 = int_to_ptr.vmem [resolvable:$true] %s23
      %29 = dma.hbm_to_vmem [thread:$0]  %s1, 1024, %s24, [#allocation3], 128, 128, 8
    $region9: #{tpu_custom_call.1} parent=1 // pred_fallthru
      _
    // Predicated region
    $region10: #{tpu_custom_call.1} parent=1 // pred_check
      _
    $region11: #{tpu_custom_call.1} parent=1 // pred_check_branch
      %31 = sbr.rel (0) target = $region13
    $region12: #{tpu_custom_call.1} parent=1 // pred_region
      %32 = dma.done [#allocation5], 16
    $region13: #{tpu_custom_call.1} parent=1 // pred_fallthru
      _
    // Predicated region
    $region14: #{tpu_custom_call.1} parent=1 // pred_check
      _
    $region15: #{tpu_custom_call.1} parent=1 // pred_check_branch
      %34 = sbr.rel (0) target = $region17
    $region16: #{tpu_custom_call.1} parent=1 // pred_region
      %35 = dma.done [#allocation3], 1024
    $region17: #{tpu_custom_call.1} parent=1 // pred_fallthru
      _
    %36 = sfence
    %v37 = vld [vmem:[#allocation6] sm:$0xff]
    %s38 = scalar_lea.vmem [#allocation6], 8
    %v39 = vld [vmem:[%s38] sm:$0xff]
    %s40 = scalar_lea.vmem [#allocation6], 16
    %v41 = vld [vmem:[%s40] sm:$0xff]
    %s42 = scalar_lea.vmem [#allocation6], 24
    %v43 = vld [vmem:[%s42] sm:$0xff]
    %s44 = scalar_lea.vmem [#allocation6], 32
    %v45 = vld [vmem:[%s44] sm:$0xff]
    %s46 = scalar_lea.vmem [#allocation6], 40
    %v47 = vld [vmem:[%s46] sm:$0xff]
    %s48 = scalar_lea.vmem [#allocation6], 48
    %v49 = vld [vmem:[%s48] sm:$0xff]
    %s50 = scalar_lea.vmem [#allocation6], 56
    %v51 = vld [vmem:[%s50] sm:$0xff]
    %s52 = sld [smem:[#allocation2]]
    %v53 = vstv %s52
    %v54 = vmul.f32 %v37, %v53
    %s55 = sld [smem:[#allocation2 + $0x1]]
    %v56 = vstv %s55
    %v57 = vmul.f32 %v39, %v56
    %v58 = vadd.f32 %v54, %v57
    %s59 = sld [smem:[#allocation2 + $0x2]]
    %v60 = vstv %s59
    %v61 = vmul.f32 %v41, %v60
    %v62 = vadd.f32 %v58, %v61
    %s63 = sld [smem:[#allocation2 + $0x3]]
    %v64 = vstv %s63
    %v65 = vmul.f32 %v43, %v64
    %v66 = vadd.f32 %v62, %v65
    %s67 = sld [smem:[#allocation2 + $0x4]]
    %v68 = vstv %s67
    %v69 = vmul.f32 %v45, %v68
    %v70 = vadd.f32 %v66, %v69
    %s71 = sld [smem:[#allocation2 + $0x5]]
    %v72 = vstv %s71
    %v73 = vmul.f32 %v47, %v72
    %v74 = vadd.f32 %v70, %v73
    %s75 = sld [smem:[#allocation2 + $0x6]]
    %v76 = vstv %s75
    %v77 = vmul.f32 %v49, %v76
    %v78 = vadd.f32 %v74, %v77
    %s79 = sld [smem:[#allocation2 + $0x7]]
    %v80 = vstv %s79
    %v81 = vmul.f32 %v51, %v80
    %v82 = vadd.f32 %v78, %v81
    %s83 = sld [smem:[#allocation2 + $0x30]]
    %v84 = vstv %s83
    %v85 = vadd.f32 %v82, %v84
    %v86 = vmul.f32 %v85, 0.5
    %v87 = vtanh.pop %v86
    %v88 = vadd.f32 %v87, 1.0
    %v89 = vmul.f32 %v88, 0.5
    %s90 = sld [smem:[#allocation2 + $0x8]]
    %v91 = vstv %s90
    %v92 = vmul.f32 %v37, %v91
    %s93 = sld [smem:[#allocation2 + $0x9]]
    %v94 = vstv %s93
    %v95 = vmul.f32 %v39, %v94
    %v96 = vadd.f32 %v92, %v95
    %s97 = sld [smem:[#allocation2 + $0xa]]
    %v98 = vstv %s97
    %v99 = vmul.f32 %v41, %v98
    %v100 = vadd.f32 %v96, %v99
    %s101 = sld [smem:[#allocation2 + $0xb]]
    %v102 = vstv %s101
    %v103 = vmul.f32 %v43, %v102
    %v104 = vadd.f32 %v100, %v103
    %s105 = sld [smem:[#allocation2 + $0xc]]
    %v106 = vstv %s105
    %v107 = vmul.f32 %v45, %v106
    %v108 = vadd.f32 %v104, %v107
    %s109 = sld [smem:[#allocation2 + $0xd]]
    %v110 = vstv %s109
    %v111 = vmul.f32 %v47, %v110
    %v112 = vadd.f32 %v108, %v111
    %s113 = sld [smem:[#allocation2 + $0xe]]
    %v114 = vstv %s113
    %v115 = vmul.f32 %v49, %v114
    %v116 = vadd.f32 %v112, %v115
    %s117 = sld [smem:[#allocation2 + $0xf]]
    %v118 = vstv %s117
    %v119 = vmul.f32 %v51, %v118
    %v120 = vadd.f32 %v116, %v119
    %s121 = sld [smem:[#allocation2 + $0x31]]
    %v122 = vstv %s121
    %v123 = vadd.f32 %v120, %v122
    %v124 = vmul.f32 %v123, 0.5
    %v125 = vtanh.pop %v124
    %v126 = vadd.f32 %v125, 1.0
    %v127 = vmul.f32 %v126, 0.5
    %s128 = sld [smem:[#allocation2 + $0x10]]
    %v129 = vstv %s128
    %v130 = vmul.f32 %v37, %v129
    %s131 = sld [smem:[#allocation2 + $0x11]]
    %v132 = vstv %s131
    %v133 = vmul.f32 %v39, %v132
    %v134 = vadd.f32 %v130, %v133
    %s135 = sld [smem:[#allocation2 + $0x12]]
    %v136 = vstv %s135
    %v137 = vmul.f32 %v41, %v136
    %v138 = vadd.f32 %v134, %v137
    %s139 = sld [smem:[#allocation2 + $0x13]]
    %v140 = vstv %s139
    %v141 = vmul.f32 %v43, %v140
    %v142 = vadd.f32 %v138, %v141
    %s143 = sld [smem:[#allocation2 + $0x14]]
    %v144 = vstv %s143
    %v145 = vmul.f32 %v45, %v144
    %v146 = vadd.f32 %v142, %v145
    %s147 = sld [smem:[#allocation2 + $0x15]]
    %v148 = vstv %s147
    %v149 = vmul.f32 %v47, %v148
    %v150 = vadd.f32 %v146, %v149
    %s151 = sld [smem:[#allocation2 + $0x16]]
    %v152 = vstv %s151
    %v153 = vmul.f32 %v49, %v152
    %v154 = vadd.f32 %v150, %v153
    %s155 = sld [smem:[#allocation2 + $0x17]]
    %v156 = vstv %s155
    %v157 = vmul.f32 %v51, %v156
    %v158 = vadd.f32 %v154, %v157
    %s159 = sld [smem:[#allocation2 + $0x32]]
    %v160 = vstv %s159
    %v161 = vadd.f32 %v158, %v160
    %v162 = vmul.f32 %v161, 0.5
    %v163 = vtanh.pop %v162
    %v164 = vadd.f32 %v163, 1.0
    %v165 = vmul.f32 %v164, 0.5
    %s166 = sld [smem:[#allocation2 + $0x18]]
    %v167 = vstv %s166
    %v168 = vmul.f32 %v37, %v167
    %s169 = sld [smem:[#allocation2 + $0x19]]
    %v170 = vstv %s169
    %v171 = vmul.f32 %v39, %v170
    %v172 = vadd.f32 %v168, %v171
    %s173 = sld [smem:[#allocation2 + $0x1a]]
    %v174 = vstv %s173
    %v175 = vmul.f32 %v41, %v174
    %v176 = vadd.f32 %v172, %v175
    %s177 = sld [smem:[#allocation2 + $0x1b]]
    %v178 = vstv %s177
    %v179 = vmul.f32 %v43, %v178
    %v180 = vadd.f32 %v176, %v179
    %s181 = sld [smem:[#allocation2 + $0x1c]]
    %v182 = vstv %s181
    %v183 = vmul.f32 %v45, %v182
    %v184 = vadd.f32 %v180, %v183
    %s185 = sld [smem:[#allocation2 + $0x1d]]
    %v186 = vstv %s185
    %v187 = vmul.f32 %v47, %v186
    %v188 = vadd.f32 %v184, %v187
    %s189 = sld [smem:[#allocation2 + $0x1e]]
    %v190 = vstv %s189
    %v191 = vmul.f32 %v49, %v190
    %v192 = vadd.f32 %v188, %v191
    %s193 = sld [smem:[#allocation2 + $0x1f]]
    %v194 = vstv %s193
    %v195 = vmul.f32 %v51, %v194
    %v196 = vadd.f32 %v192, %v195
    %s197 = sld [smem:[#allocation2 + $0x33]]
    %v198 = vstv %s197
    %v199 = vadd.f32 %v196, %v198
    %v200 = vmul.f32 %v199, 0.5
    %v201 = vtanh.pop %v200
    %v202 = vadd.f32 %v201, 1.0
    %v203 = vmul.f32 %v202, 0.5
    %s204 = sld [smem:[#allocation2 + $0x20]]
    %v205 = vstv %s204
    %v206 = vmul.f32 %v37, %v205
    %s207 = sld [smem:[#allocation2 + $0x21]]
    %v208 = vstv %s207
    %v209 = vmul.f32 %v39, %v208
    %v210 = vadd.f32 %v206, %v209
    %s211 = sld [smem:[#allocation2 + $0x22]]
    %v212 = vstv %s211
    %v213 = vmul.f32 %v41, %v212
    %v214 = vadd.f32 %v210, %v213
    %s215 = sld [smem:[#allocation2 + $0x23]]
    %v216 = vstv %s215
    %v217 = vmul.f32 %v43, %v216
    %v218 = vadd.f32 %v214, %v217
    %s219 = sld [smem:[#allocation2 + $0x24]]
    %v220 = vstv %s219
    %v221 = vmul.f32 %v45, %v220
    %v222 = vadd.f32 %v218, %v221
    %s223 = sld [smem:[#allocation2 + $0x25]]
    %v224 = vstv %s223
    %v225 = vmul.f32 %v47, %v224
    %v226 = vadd.f32 %v222, %v225
    %s227 = sld [smem:[#allocation2 + $0x26]]
    %v228 = vstv %s227
    %v229 = vmul.f32 %v49, %v228
    %v230 = vadd.f32 %v226, %v229
    %s231 = sld [smem:[#allocation2 + $0x27]]
    %v232 = vstv %s231
    %v233 = vmul.f32 %v51, %v232
    %v234 = vadd.f32 %v230, %v233
    %s235 = sld [smem:[#allocation2 + $0x34]]
    %v236 = vstv %s235
    %v237 = vadd.f32 %v234, %v236
    %v238 = vmul.f32 %v237, 0.5
    %v239 = vtanh.pop %v238
    %v240 = vadd.f32 %v239, 1.0
    %v241 = vmul.f32 %v240, 0.5
    %s242 = sld [smem:[#allocation2 + $0x28]]
    %v243 = vstv %s242
    %v244 = vmul.f32 %v37, %v243
    %s245 = sld [smem:[#allocation2 + $0x29]]
    %v246 = vstv %s245
    %v247 = vmul.f32 %v39, %v246
    %v248 = vadd.f32 %v244, %v247
    %s249 = sld [smem:[#allocation2 + $0x2a]]
    %v250 = vstv %s249
    %v251 = vmul.f32 %v41, %v250
    %v252 = vadd.f32 %v248, %v251
    %s253 = sld [smem:[#allocation2 + $0x2b]]
    %v254 = vstv %s253
    %v255 = vmul.f32 %v43, %v254
    %v256 = vadd.f32 %v252, %v255
    %s257 = sld [smem:[#allocation2 + $0x2c]]
    %v258 = vstv %s257
    %v259 = vmul.f32 %v45, %v258
    %v260 = vadd.f32 %v256, %v259
    %s261 = sld [smem:[#allocation2 + $0x2d]]
    %v262 = vstv %s261
    %v263 = vmul.f32 %v47, %v262
    %v264 = vadd.f32 %v260, %v263
    %s265 = sld [smem:[#allocation2 + $0x2e]]
    %v266 = vstv %s265
    %v267 = vmul.f32 %v49, %v266
    %v268 = vadd.f32 %v264, %v267
    %s269 = sld [smem:[#allocation2 + $0x2f]]
    %v270 = vstv %s269
    %v271 = vmul.f32 %v51, %v270
    %v272 = vadd.f32 %v268, %v271
    %s273 = sld [smem:[#allocation2 + $0x35]]
    %v274 = vstv %s273
    %v275 = vadd.f32 %v272, %v274
    %v276 = vmul.f32 %v275, 0.5
    %v277 = vtanh.pop %v276
    %v278 = vadd.f32 %v277, 1.0
    %v279 = vmul.f32 %v278, 0.5
    %s280 = sld [smem:[#allocation2 + $0x36]]
    %v281 = vstv %s280
    %v282 = vmul.f32 %v89, %v281
    %s283 = sld [smem:[#allocation2 + $0x37]]
    %v284 = vstv %s283
    %v285 = vmul.f32 %v127, %v284
    %v286 = vadd.f32 %v282, %v285
    %s287 = sld [smem:[#allocation2 + $0x38]]
    %v288 = vstv %s287
    %v289 = vmul.f32 %v165, %v288
    %v290 = vadd.f32 %v286, %v289
    %s291 = sld [smem:[#allocation2 + $0x39]]
    %v292 = vstv %s291
    %v293 = vmul.f32 %v203, %v292
    %v294 = vadd.f32 %v290, %v293
    %s295 = sld [smem:[#allocation2 + $0x3a]]
    %v296 = vstv %s295
    %v297 = vmul.f32 %v241, %v296
    %v298 = vadd.f32 %v294, %v297
    %s299 = sld [smem:[#allocation2 + $0x3b]]
    %v300 = vstv %s299
    %v301 = vmul.f32 %v279, %v300
    %v302 = vadd.f32 %v298, %v301
    %s303 = sld [smem:[#allocation2 + $0x4e]]
    %v304 = vstv %s303
    %v305 = vadd.f32 %v302, %v304
    %v306 = vmul.f32 %v305, 0.5
    %v307 = vtanh.pop %v306
    %v308 = vadd.f32 %v307, 1.0
    %v309 = vmul.f32 %v308, 0.5
    %s310 = sld [smem:[#allocation2 + $0x3c]]
    %v311 = vstv %s310
    %v312 = vmul.f32 %v89, %v311
    %s313 = sld [smem:[#allocation2 + $0x3d]]
    %v314 = vstv %s313
    %v315 = vmul.f32 %v127, %v314
    %v316 = vadd.f32 %v312, %v315
    %s317 = sld [smem:[#allocation2 + $0x3e]]
    %v318 = vstv %s317
    %v319 = vmul.f32 %v165, %v318
    %v320 = vadd.f32 %v316, %v319
    %s321 = sld [smem:[#allocation2 + $0x3f]]
    %v322 = vstv %s321
    %v323 = vmul.f32 %v203, %v322
    %v324 = vadd.f32 %v320, %v323
    %s325 = sld [smem:[#allocation2 + $0x40]]
    %v326 = vstv %s325
    %v327 = vmul.f32 %v241, %v326
    %v328 = vadd.f32 %v324, %v327
    %s329 = sld [smem:[#allocation2 + $0x41]]
    %v330 = vstv %s329
    %v331 = vmul.f32 %v279, %v330
    %v332 = vadd.f32 %v328, %v331
    %s333 = sld [smem:[#allocation2 + $0x4f]]
    %v334 = vstv %s333
    %v335 = vadd.f32 %v332, %v334
    %v336 = vmul.f32 %v335, 0.5
    %v337 = vtanh.pop %v336
    %v338 = vadd.f32 %v337, 1.0
    %v339 = vmul.f32 %v338, 0.5
    %s340 = sld [smem:[#allocation2 + $0x42]]
    %v341 = vstv %s340
    %v342 = vmul.f32 %v89, %v341
    %s343 = sld [smem:[#allocation2 + $0x43]]
    %v344 = vstv %s343
    %v345 = vmul.f32 %v127, %v344
    %v346 = vadd.f32 %v342, %v345
    %s347 = sld [smem:[#allocation2 + $0x44]]
    %v348 = vstv %s347
    %v349 = vmul.f32 %v165, %v348
    %v350 = vadd.f32 %v346, %v349
    %s351 = sld [smem:[#allocation2 + $0x45]]
    %v352 = vstv %s351
    %v353 = vmul.f32 %v203, %v352
    %v354 = vadd.f32 %v350, %v353
    %s355 = sld [smem:[#allocation2 + $0x46]]
    %v356 = vstv %s355
    %v357 = vmul.f32 %v241, %v356
    %v358 = vadd.f32 %v354, %v357
    %s359 = sld [smem:[#allocation2 + $0x47]]
    %v360 = vstv %s359
    %v361 = vmul.f32 %v279, %v360
    %v362 = vadd.f32 %v358, %v361
    %s363 = sld [smem:[#allocation2 + $0x50]]
    %v364 = vstv %s363
    %v365 = vadd.f32 %v362, %v364
    %v366 = vmul.f32 %v365, 0.5
    %v367 = vtanh.pop %v366
    %v368 = vadd.f32 %v367, 1.0
    %v369 = vmul.f32 %v368, 0.5
    %s370 = sld [smem:[#allocation2 + $0x48]]
    %v371 = vstv %s370
    %v372 = vmul.f32 %v89, %v371
    %s373 = sld [smem:[#allocation2 + $0x49]]
    %v374 = vstv %s373
    %v375 = vmul.f32 %v127, %v374
    %v376 = vadd.f32 %v372, %v375
    %s377 = sld [smem:[#allocation2 + $0x4a]]
    %v378 = vstv %s377
    %v379 = vmul.f32 %v165, %v378
    %v380 = vadd.f32 %v376, %v379
    %s381 = sld [smem:[#allocation2 + $0x4b]]
    %v382 = vstv %s381
    %v383 = vmul.f32 %v203, %v382
    %v384 = vadd.f32 %v380, %v383
    %s385 = sld [smem:[#allocation2 + $0x4c]]
    %v386 = vstv %s385
    %v387 = vmul.f32 %v241, %v386
    %v388 = vadd.f32 %v384, %v387
    %s389 = sld [smem:[#allocation2 + $0x4d]]
    %v390 = vstv %s389
    %v391 = vmul.f32 %v279, %v390
    %v392 = vadd.f32 %v388, %v391
    %s393 = sld [smem:[#allocation2 + $0x51]]
    %v394 = vstv %s393
    %v395 = vadd.f32 %v392, %v394
    %v396 = vmul.f32 %v395, 0.5
    %v397 = vtanh.pop %v396
    %v398 = vadd.f32 %v397, 1.0
    %v399 = vmul.f32 %v398, 0.5
    %s400 = sld [smem:[#allocation2 + $0x52]]
    %v401 = vstv %s400
    %v402 = vmul.f32 %v309, %v401
    %s403 = sld [smem:[#allocation2 + $0x53]]
    %v404 = vstv %s403
    %v405 = vmul.f32 %v339, %v404
    %v406 = vadd.f32 %v402, %v405
    %s407 = sld [smem:[#allocation2 + $0x54]]
    %v408 = vstv %s407
    %v409 = vmul.f32 %v369, %v408
    %v410 = vadd.f32 %v406, %v409
    %s411 = sld [smem:[#allocation2 + $0x55]]
    %v412 = vstv %s411
    %v413 = vmul.f32 %v399, %v412
    %v414 = vadd.f32 %v410, %v413
    %s415 = sld [smem:[#allocation2 + $0x5a]]
    %v416 = vstv %s415
    %v417 = vadd.f32 %v414, %v416
    %v418 = vmul.f32 %v417, 0.5
    %v419 = vtanh.pop %v418
    %v420 = vadd.f32 %v419, 1.0
    %v421 = vmul.f32 %v420, 0.5
    %s422 = sld [smem:[#allocation2 + $0x56]]
    %v423 = vstv %s422
    %v424 = vmul.f32 %v309, %v423
    %s425 = sld [smem:[#allocation2 + $0x57]]
    %v426 = vstv %s425
    %v427 = vmul.f32 %v339, %v426
    %v428 = vadd.f32 %v424, %v427
    %s429 = sld [smem:[#allocation2 + $0x58]]
    %v430 = vstv %s429
    %v431 = vmul.f32 %v369, %v430
    %v432 = vadd.f32 %v428, %v431
    %s433 = sld [smem:[#allocation2 + $0x59]]
    %v434 = vstv %s433
    %v435 = vmul.f32 %v399, %v434
    %v436 = vadd.f32 %v432, %v435
    %s437 = sld [smem:[#allocation2 + $0x5b]]
    %v438 = vstv %s437
    %v439 = vadd.f32 %v436, %v438
    %v440 = vmul.f32 %v439, 0.5
    %v441 = vtanh.pop %v440
    %v442 = vadd.f32 %v441, 1.0
    %v443 = vmul.f32 %v442, 0.5
    %s444 = sld [smem:[#allocation2 + $0x5c]]
    %v445 = vstv %s444
    %v446 = vmul.f32 %v421, %v445
    %s447 = sld [smem:[#allocation2 + $0x5d]]
    %v448 = vstv %s447
    %v449 = vmul.f32 %v443, %v448
    %v450 = vadd.f32 %v446, %v449
    %s451 = sld [smem:[#allocation2 + $0x5e]]
    %v452 = vstv %s451
    %v453 = vadd.f32 %v450, %v452
    %v454 = vmul.f32 %v453, 0.5
    %v455 = vtanh.pop %v454
    %v456 = vadd.f32 %v455, 1.0
    %v457 = vmul.f32 %v456, 0.5
    %458 = vst [vmem:[#allocation7] sm:$0xff] %v457
    // Predicated region
    $region18: #{tpu_custom_call.1} parent=1 // pred_check
      _
    $region19: #{tpu_custom_call.1} parent=1 // pred_check_branch
      %460 = sbr.rel (0) target = $region21
    $region20: #{tpu_custom_call.1} parent=1 // pred_region
      %s462 = ssub.s32 128, 128
      %463 = vsyncadd [#allocation4], %s462
      %s465 = sshll.u32 [#allocation7], 4
      %s466 = int_to_ptr.vmem [resolvable:$true] %s465
      %468 = dma.vmem_to_hbm [thread:$0]  %s466, 128, %s2, [#allocation4]
    $region21: #{tpu_custom_call.1} parent=1 // pred_fallthru
      _
    // Predicated region
    $region22: #{tpu_custom_call.1} parent=1 // pred_check
      _
    $region23: #{tpu_custom_call.1} parent=1 // pred_check_branch
      %470 = sbr.rel (0) target = $region25
    $region24: #{tpu_custom_call.1} parent=1 // pred_region
      %471 = dma.done [#allocation4], 128
    $region25: #{tpu_custom_call.1} parent=1 // pred_fallthru
      _
    %472 = vsyncpa [#allocation3], 1
    %473 = vsyncpa [#allocation4], 1
    %474 = vsyncpa [#allocation5], 1

</llo_original>
